<compile_context>
chip_gen: v7x
topology: tpu7x:2x2x1
jax: 0.10.0
libtpu: 0.0.40
codegen_flags: <defaults>
</compile_context>

<pallas_src>
import functools

import jax
import jax.numpy as jnp
from jax import lax
from jax.experimental import pallas as pl
from jax.experimental.pallas import tpu as pltpu


def _pick_tile_l(L, c_in, c_out, itemsize, tile_l_max, vmem_budget):
    """Largest 128-multiple lane tile <= tile_l_max whose working set fits the VMEM budget."""
    l128 = ((L + 127) // 128) * 128
    cap = max(128, min(tile_l_max, l128))
    tile = 128
    for t in range(128, cap + 1, 128):
        # double-buffered pipeline blocks: x tile, two 128-wide halo blocks, output tile
        bufs = 2 * itemsize * (c_in * t + 2 * c_in * 128 + c_out * t)
        # in-kernel temporaries: xm1/xp1 in operand dtype, z / relu / residual in f32
        temps = 2 * c_in * t * itemsize + 3 * c_out * t * 4
        if bufs + temps <= vmem_budget:
            tile = t
    return tile


def _cnn_unit_kernel(*refs, use_res_conv, has_halo):
    # ref order: x, [x_left_halo, x_right_halo], w_taps, bias, [w_res, b_res], out
    if has_halo:
        if use_res_conv:
            x_ref, xl_ref, xr_ref, w_ref, b_ref, wr_ref, br_ref, out_ref = refs
        else:
            x_ref, xl_ref, xr_ref, w_ref, b_ref, out_ref = refs
    else:
        if use_res_conv:
            x_ref, w_ref, b_ref, wr_ref, br_ref, out_ref = refs
        else:
            x_ref, w_ref, b_ref, out_ref = refs

    f32 = jnp.float32
    x = x_ref[0]                                   # (C_in, T), operand dtype (f32 or bf16)
    c_in, t = x.shape

    # ---- shifted taps via XLU rolls; only the edge lane is patched from the halo blocks ------
    if has_halo:
        li = pl.program_id(1)
        nl = pl.num_programs(1)
        left_col = xl_ref[0][:, 127:128] * (li > 0).astype(x.dtype)        # (C_in,1), 0 at start
        right_col = xr_ref[0][:, 0:1] * (li < nl - 1).astype(x.dtype)      # (C_in,1), 0 at end
    else:
        left_col = jnp.zeros((c_in, 1), x.dtype)
        right_col = jnp.zeros((c_in, 1), x.dtype)

    lane = lax.broadcasted_iota(jnp.int32, (c_in, t), 1)
    xm1 = jnp.where(lane == 0, left_col, pltpu.roll(x, shift=1, axis=1))       # x[:, i-1]
    xp1 = jnp.where(lane == t - 1, right_col, pltpu.roll(x, shift=t - 1, axis=1))  # x[:, i+1]

    # ---- conv branch: 3 accumulating MXU matmuls (no K-stack copy), f32 accumulation --------
    z = jnp.dot(w_ref[0], xm1, preferred_element_type=f32)
    z = z + jnp.dot(w_ref[1], x, preferred_element_type=f32)
    z = z + jnp.dot(w_ref[2], xp1, preferred_element_type=f32)
    z = z + b_ref[...]                                       # (C_out, 1) broadcast bias
    y = jnp.maximum(z, 0.0)                                  # ReLU on the conv branch only

    # ---- residual branch: separate 1x1 matmul (no zero-padded MXU rows) or identity ---------
    if use_res_conv:
        res = jnp.dot(wr_ref[...], x, preferred_element_type=f32) + br_ref[...]
    else:
        res = x.astype(f32)

    out_ref[0] = (y + res).astype(out_ref.dtype)


def cnn_unit_forward(x, w1, b1, wres=None, bres=None, *,
                     tile_l_max=1024, vmem_limit_bytes=32 * 1024 * 1024):
    """x: (N, C_in, L); w1: (C_out, C_in, 3); b1: (C_out,);
    wres: (C_out, C_in) or None; bres: (C_out,) or None (None => identity residual)."""
    N, C_in, L = x.shape
    C_out = w1.shape[0]
    use_res_conv = wres is not None
    assert use_res_conv or C_in == C_out, "identity residual requires dim_in == dim_out"
    f32 = jnp.float32

    # Keep bf16 operands bf16 into the MXU; everything else is fed as f32.
    op_dtype = jnp.bfloat16 if x.dtype == jnp.bfloat16 else f32
    itemsize = jnp.dtype(op_dtype).itemsize

    tile_l = _pick_tile_l(L, C_in, C_out, itemsize, tile_l_max,
                          vmem_budget=(vmem_limit_bytes * 5) // 8)
    L_pad = ((L + tile_l - 1) // tile_l) * tile_l
    num_l = L_pad // tile_l
    has_halo = num_l > 1

    x_in = x.astype(op_dtype)
    if L_pad != L:
        # Zero lane-padding at the end only; padded positions double as the p=1 conv padding and
        # are sliced off the output.  Keeps every store lane-dense and every block pipelined.
        x_in = jnp.pad(x_in, ((0, 0), (0, 0), (0, L_pad - L)))

    # Tap-major conv weights (3, C_out, C_in); residual weights stay separate (no zero M-rows).
    w_taps = jnp.transpose(w1, (2, 0, 1)).astype(op_dtype)
    b_arg = b1.astype(f32)[:, None]                              # (C_out, 1)

    in_specs = [pl.BlockSpec((1, C_in, tile_l), lambda n, l: (n, 0, l))]
    args = [x_in]
    if has_halo:
        r = tile_l // 128
        nb = L_pad // 128
        # Left / right 128-wide neighbour views (same array, different index maps); boundary tiles
        # clamp the block index and the kernel zeroes the single consumed edge column instead.
        in_specs += [
            pl.BlockSpec((1, C_in, 128),
                         lambda n, l: (n, 0, jnp.maximum(l * r - 1, 0))),
            pl.BlockSpec((1, C_in, 128),
                         lambda n, l: (n, 0, jnp.minimum((l + 1) * r, nb - 1))),
        ]
        args += [x_in, x_in]
    # Weight / bias blocks have constant index maps -> kept resident by the pipeline.
    in_specs += [pl.BlockSpec((3, C_out, C_in), lambda n, l: (0, 0, 0)),
                 pl.BlockSpec((C_out, 1), lambda n, l: (0, 0))]
    args += [w_taps, b_arg]
    if use_res_conv:
        in_specs += [pl.BlockSpec((C_out, C_in), lambda n, l: (0, 0)),
                     pl.BlockSpec((C_out, 1), lambda n, l: (0, 0))]
        args += [wres.astype(op_dtype), bres.astype(f32)[:, None]]

    kernel = functools.partial(_cnn_unit_kernel,
                               use_res_conv=use_res_conv, has_halo=has_halo)

    out = pl.pallas_call(
        kernel,
        out_shape=jax.ShapeDtypeStruct((N, C_out, L_pad), x.dtype),
        grid_spec=pltpu.PrefetchScalarGridSpec(
            num_scalar_prefetch=0,
            grid=(N, num_l),
            in_specs=in_specs,
            out_specs=pl.BlockSpec((1, C_out, tile_l), lambda n, l: (n, 0, l)),
        ),
        compiler_params=pltpu.CompilerParams(
            dimension_semantics=("parallel", "parallel"),
            vmem_limit_bytes=vmem_limit_bytes),
    )(*args)

    return out[:, :, :L] if L_pad != L else out


def _reference(x, w1, b1, wres, bres):
    # Pure-JAX reference of the PyTorch module for validation.
    y = lax.conv_general_dilated(
        x, w1, window_strides=(1,), padding=((1, 1),),
        dimension_numbers=("NCH", "OIH", "NCH"))
    y = y + b1[None, :, None]
    y = jnp.maximum(y, 0.0)
    if wres is not None:
        res = lax.conv_general_dilated(
            x, wres[:, :, None], window_strides=(1,), padding=((0, 0),),
            dimension_numbers=("NCH", "OIH", "NCH")) + bres[None, :, None]
    else:
        res = x
    return res + y


def _init_params(key, c_in, c_out, use_res):
    k1, k2, k3, k4 = jax.random.split(key, 4)
    bound1 = 1.0 / (c_in * 3) ** 0.5
    w1 = jax.random.uniform(k1, (c_out, c_in, 3), jnp.float32, -bound1, bound1)
    b1 = jax.random.uniform(k2, (c_out,), jnp.float32, -bound1, bound1)
    if use_res:
        br = 1.0 / c_in ** 0.5
        wres = jax.random.uniform(k3, (c_out, c_in), jnp.float32, -br, br)
        bres = jax.random.uniform(k4, (c_out,), jnp.float32, -br, br)
    else:
        wres = bres = None
    return w1, b1, wres, bres


if __name__ == "__main__":
    key = jax.random.PRNGKey(0)
    ks = jax.random.split(key, 6)

    # Case 1: dim_in != dim_out (1x1-conv residual), tiny unaligned L=16 -> padded single tile.
    N, C_in, C_out, L = 2, 4, 8, 16
    x = jax.random.normal(ks[0], (N, C_in, L), jnp.float32)
    w1, b1, wres, bres = _init_params(ks[1], C_in, C_out, True)
    out = jax.block_until_ready(cnn_unit_forward(x, w1, b1, wres, bres))
    ref = _reference(x, w1, b1, wres, bres)
    assert out.shape == ref.shape
    assert jnp.allclose(out, ref, atol=1e-5, rtol=1e-5), "case1 mismatch vs reference"

    # Case 2: dim_in == dim_out (identity residual), L=256 in two 128-lane tiles
    #         -> exercises the roll + edge-column halo path.
    N2, C2, L2 = 2, 8, 256
    x2 = jax.random.normal(ks[2], (N2, C2, L2), jnp.float32)
    w1b, b1b, _, _ = _init_params(ks[3], C2, C2, False)
    out2 = jax.block_until_ready(cnn_unit_forward(x2, w1b, b1b, None, None, tile_l_max=128))
    ref2 = _reference(x2, w1b, b1b, None, None)
    assert out2.shape == ref2.shape
    assert jnp.allclose(out2, ref2, atol=1e-5, rtol=1e-5), "case2 mismatch vs reference"

    # Case 3: bf16 operands (bf16 MXU path), unaligned L=384 -> padded to 512, two 256-lane tiles
    #         with halos, output sliced back; 1x1-conv residual.
    N3, C_in3, C_out3, L3 = 2, 8, 16, 384
    x3 = jax.random.normal(ks[4], (N3, C_in3, L3), jnp.float32).astype(jnp.bfloat16)
    w1c, b1c, wresc, bresc = _init_params(ks[5], C_in3, C_out3, True)
    w1c = w1c.astype(jnp.bfloat16)
    wresc = wresc.astype(jnp.bfloat16)
    out3 = jax.block_until_ready(
        cnn_unit_forward(x3, w1c, b1c, wresc, bresc, tile_l_max=256))
    ref3 = _reference(x3.astype(jnp.float32), w1c.astype(jnp.float32), b1c,
                      wresc.astype(jnp.float32), bresc)
    assert out3.shape == ref3.shape
    assert jnp.allclose(out3.astype(jnp.float32), ref3, atol=5e-2, rtol=5e-2), \
        "case3 mismatch vs reference"

    print("KERNEL_OK")
</pallas_src>

<mosaic_0001>
module attributes {stable_mosaic.version = 11 : i64} {
  func.func @_cnn_unit_kernel(%arg0: i32, %arg1: i32, %arg2: memref<1x4x128xf32, #tpu.memory_space<vmem>>, %arg3: memref<3x8x4xf32, #tpu.memory_space<vmem>>, %arg4: memref<8x1xf32, #tpu.memory_space<vmem>>, %arg5: memref<8x4xf32, #tpu.memory_space<vmem>>, %arg6: memref<8x1xf32, #tpu.memory_space<vmem>>, %arg7: memref<1x8x128xf32, #tpu.memory_space<vmem>>) attributes {dimension_semantics = [#tpu.dimension_semantics<parallel>, #tpu.dimension_semantics<parallel>], iteration_bounds = array<i64: 2, 1>, scalar_prefetch = 0 : i64, scratch_operands = 0 : i64, tpu.core_type = #tpu.core_type<tc>, window_params = [{transform_indices = @transform_0, window_bounds = array<i64: 1, 4, 128>}, {pipeline_mode = #tpu.pipeline_mode<synchronous>, transform_indices = @transform_1, window_bounds = array<i64: 3, 8, 4>}, {pipeline_mode = #tpu.pipeline_mode<synchronous>, transform_indices = @transform_2, window_bounds = array<i64: 8, 1>}, {pipeline_mode = #tpu.pipeline_mode<synchronous>, transform_indices = @transform_3, window_bounds = array<i64: 8, 4>}, {pipeline_mode = #tpu.pipeline_mode<synchronous>, transform_indices = @transform_4, window_bounds = array<i64: 8, 1>}, {transform_indices = @transform_5, window_bounds = array<i64: 1, 8, 128>}]} {
    %c0 = arith.constant 0 : index
    %c0_0 = arith.constant 0 : index
    %c0_1 = arith.constant 0 : index
    %0 = vector.load %arg2[%c0, %c0_0, %c0_1] : memref<1x4x128xf32, #tpu.memory_space<vmem>>, vector<1x4x128xf32>
    %1 = vector.shape_cast %0 : vector<1x4x128xf32> to vector<4x128xf32>
    %cst = arith.constant 0.000000e+00 : f32
    %2 = vector.broadcast %cst : f32 to vector<4x1xf32>
    %cst_2 = arith.constant 0.000000e+00 : f32
    %3 = vector.broadcast %cst_2 : f32 to vector<4x1xf32>
    %4 = tpu.iota {dimensions = array<i32: 1>} : vector<4x128xi32>
    %c0_i32 = arith.constant 0 : i32
    %5 = vector.broadcast %c0_i32 : i32 to vector<4x128xi32>
    %6 = arith.cmpi eq, %4, %5 : vector<4x128xi32>
    %c1_i32 = arith.constant 1 : i32
    %7 = tpu.dynamic_rotate %1 by %c1_i32 dim 1 : vector<4x128xf32>, i32 -> vector<4x128xf32>
    %8 = vector.shape_cast %2 : vector<4x1xf32> to vector<4x1xf32>
    %9 = vector.broadcast %8 : vector<4x1xf32> to vector<4x128xf32>
    %10 = arith.select %6, %9, %7 : vector<4x128xi1>, vector<4x128xf32>
    %c127_i32 = arith.constant 127 : i32
    %11 = vector.broadcast %c127_i32 : i32 to vector<4x128xi32>
    %12 = arith.cmpi eq, %4, %11 : vector<4x128xi32>
    %c127_i32_3 = arith.constant 127 : i32
    %13 = tpu.dynamic_rotate %1 by %c127_i32_3 dim 1 : vector<4x128xf32>, i32 -> vector<4x128xf32>
    %14 = vector.shape_cast %3 : vector<4x1xf32> to vector<4x1xf32>
    %15 = vector.broadcast %14 : vector<4x1xf32> to vector<4x128xf32>
    %16 = arith.select %12, %15, %13 : vector<4x128xi1>, vector<4x128xf32>
    %c0_4 = arith.constant 0 : index
    %c0_5 = arith.constant 0 : index
    %c0_6 = arith.constant 0 : index
    %17 = vector.load %arg3[%c0_4, %c0_5, %c0_6] : memref<3x8x4xf32, #tpu.memory_space<vmem>>, vector<1x8x4xf32>
    %18 = vector.shape_cast %17 : vector<1x8x4xf32> to vector<8x4xf32>
    %cst_7 = arith.constant dense<0.000000e+00> : vector<8x128xf32>
    %19 = tpu.matmul %18, %10, %cst_7 {dimension_numbers = #tpu.dot_dimension_numbers<[1], [0], [0], [1], [0, 0, 1, 1], [], []>} : vector<8x4xf32>, vector<4x128xf32>, vector<8x128xf32> -> vector<8x128xf32>
    %c1 = arith.constant 1 : index
    %c0_8 = arith.constant 0 : index
    %c0_9 = arith.constant 0 : index
    %20 = vector.load %arg3[%c1, %c0_8, %c0_9] : memref<3x8x4xf32, #tpu.memory_space<vmem>>, vector<1x8x4xf32>
    %21 = vector.shape_cast %20 : vector<1x8x4xf32> to vector<8x4xf32>
    %cst_10 = arith.constant dense<0.000000e+00> : vector<8x128xf32>
    %22 = tpu.matmul %21, %1, %cst_10 {dimension_numbers = #tpu.dot_dimension_numbers<[1], [0], [0], [1], [0, 0, 1, 1], [], []>} : vector<8x4xf32>, vector<4x128xf32>, vector<8x128xf32> -> vector<8x128xf32>
    %23 = arith.addf %19, %22 : vector<8x128xf32>
    %c2 = arith.constant 2 : index
    %c0_11 = arith.constant 0 : index
    %c0_12 = arith.constant 0 : index
    %24 = vector.load %arg3[%c2, %c0_11, %c0_12] : memref<3x8x4xf32, #tpu.memory_space<vmem>>, vector<1x8x4xf32>
    %25 = vector.shape_cast %24 : vector<1x8x4xf32> to vector<8x4xf32>
    %cst_13 = arith.constant dense<0.000000e+00> : vector<8x128xf32>
    %26 = tpu.matmul %25, %16, %cst_13 {dimension_numbers = #tpu.dot_dimension_numbers<[1], [0], [0], [1], [0, 0, 1, 1], [], []>} : vector<8x4xf32>, vector<4x128xf32>, vector<8x128xf32> -> vector<8x128xf32>
    %27 = arith.addf %23, %26 : vector<8x128xf32>
    %c0_14 = arith.constant 0 : index
    %c0_15 = arith.constant 0 : index
    %28 = vector.load %arg4[%c0_14, %c0_15] : memref<8x1xf32, #tpu.memory_space<vmem>>, vector<8x1xf32>
    %29 = vector.broadcast %28 : vector<8x1xf32> to vector<8x128xf32>
    %30 = arith.addf %27, %29 : vector<8x128xf32>
    %cst_16 = arith.constant 0.000000e+00 : f32
    %31 = vector.broadcast %cst_16 : f32 to vector<8x128xf32>
    %32 = arith.maximumf %30, %31 : vector<8x128xf32>
    %c0_17 = arith.constant 0 : index
    %c0_18 = arith.constant 0 : index
    %33 = vector.load %arg5[%c0_17, %c0_18] : memref<8x4xf32, #tpu.memory_space<vmem>>, vector<8x4xf32>
    %cst_19 = arith.constant dense<0.000000e+00> : vector<8x128xf32>
    %34 = tpu.matmul %33, %1, %cst_19 {dimension_numbers = #tpu.dot_dimension_numbers<[1], [0], [0], [1], [0, 0, 1, 1], [], []>} : vector<8x4xf32>, vector<4x128xf32>, vector<8x128xf32> -> vector<8x128xf32>
    %c0_20 = arith.constant 0 : index
    %c0_21 = arith.constant 0 : index
    %35 = vector.load %arg6[%c0_20, %c0_21] : memref<8x1xf32, #tpu.memory_space<vmem>>, vector<8x1xf32>
    %36 = vector.broadcast %35 : vector<8x1xf32> to vector<8x128xf32>
    %37 = arith.addf %34, %36 : vector<8x128xf32>
    %38 = arith.addf %32, %37 : vector<8x128xf32>
    %c0_22 = arith.constant 0 : index
    %c0_23 = arith.constant 0 : index
    %c0_24 = arith.constant 0 : index
    %39 = vector.load %arg7[%c0_22, %c0_23, %c0_24] : memref<1x8x128xf32, #tpu.memory_space<vmem>>, vector<1x8x128xf32>
    %40 = vector.shape_cast %39 : vector<1x8x128xf32> to vector<8x128xf32>
    %41 = vector.shape_cast %38 : vector<8x128xf32> to vector<1x8x128xf32>
    tpu.vector_store %arg7[%c0_22, %c0_23, %c0_24], %41 {strides = array<i32>} : memref<1x8x128xf32, #tpu.memory_space<vmem>>, vector<1x8x128xf32>,
    return
  }
  func.func @transform_0(%arg0: i32, %arg1: i32) -> (i32, i32, i32) {
    %c0_i32 = arith.constant 0 : i32
    %c0_i32_0 = arith.constant 0 : i32
    return %arg0, %c0_i32, %arg1 : i32, i32, i32
  }
  func.func @transform_1(%arg0: i32, %arg1: i32) -> (i32, i32, i32) {
    %c0_i32 = arith.constant 0 : i32
    %c0_i32_0 = arith.constant 0 : i32
    %c0_i32_1 = arith.constant 0 : i32
    %c0_i32_2 = arith.constant 0 : i32
    return %c0_i32, %c0_i32_0, %c0_i32_1 : i32, i32, i32
  }
  func.func @transform_2(%arg0: i32, %arg1: i32) -> (i32, i32) {
    %c0_i32 = arith.constant 0 : i32
    %c0_i32_0 = arith.constant 0 : i32
    %c0_i32_1 = arith.constant 0 : i32
    return %c0_i32, %c0_i32_0 : i32, i32
  }
  func.func @transform_3(%arg0: i32, %arg1: i32) -> (i32, i32) {
    %c0_i32 = arith.constant 0 : i32
    %c0_i32_0 = arith.constant 0 : i32
    %c0_i32_1 = arith.constant 0 : i32
    return %c0_i32, %c0_i32_0 : i32, i32
  }
  func.func @transform_4(%arg0: i32, %arg1: i32) -> (i32, i32) {
    %c0_i32 = arith.constant 0 : i32
    %c0_i32_0 = arith.constant 0 : i32
    %c0_i32_1 = arith.constant 0 : i32
    return %c0_i32, %c0_i32_0 : i32, i32
  }
  func.func @transform_5(%arg0: i32, %arg1: i32) -> (i32, i32, i32) {
    %c0_i32 = arith.constant 0 : i32
    %c0_i32_0 = arith.constant 0 : i32
    return %arg0, %c0_i32, %arg1 : i32, i32, i32
  }
}

</mosaic_0001>

<llo_original>
// kernel: tpu_custom_call.1
$region0: #{tpu_custom_call.1}
  #allocation0 [shape = 'u32[]', space=smem, size = 0x4, offset = 0x4, fixed_abs, tag = 'smem constant byte address 0x4 - core index']
  #allocation1 [shape = 'u32[144,128]{1,0:T(1,128)}', space=vmem, size = 0x12000, scoped, tag = 'internal scratch']
  %s0 = inlined_call_operand.vmem [shape: f32[2,4,128], index: 0, kind: input, shape index: {}]
  %s1 = inlined_call_operand.vmem [shape: f32[3,8,4], index: 1, kind: input, shape index: {}]
  %s2 = inlined_call_operand.vmem [shape: f32[8,1], index: 2, kind: input, shape index: {}]
  %s3 = inlined_call_operand.vmem [shape: f32[8,4], index: 3, kind: input, shape index: {}]
  %s4 = inlined_call_operand.vmem [shape: f32[8,1], index: 4, kind: input, shape index: {}]
  %s5 = inlined_call_operand.hbm [shape: f32[2,8,128], index: 5, kind: output, shape index: {}]
  %s6 = sld [smem:[#allocation0]]
  $region53: #{tpu_custom_call.1} parent=0
    _
  %s8 = ssub.s32 1, %s6
  %s9 = scalar_select 0, %s8, %s6
  $region1: #{tpu_custom_call.1} parent=0
    #allocation2 [shape = 'u8[8192]{0}', space=vmem, size = 0x2000, scoped, tag = 'output window, operand 0']
    #allocation3 [shape = 's32[2]{0}', space=sflag, size = 0x8, scoped, tag = 'scoped memory for tpu_custom_call.1']
    %10 = vsyncpa [#allocation3], 0
    %s11 = scalar_lea.sflag [#allocation3], 1
    %12 = vsyncpa %s11, 0
    loop: start=0, step=1, limit=4
    $region2: #{tpu_custom_call.1} parent=1 // loop_pre_header
      _
    $region3: #{tpu_custom_call.1} parent=1 // loop_header
      %s14 = sphi 0, %s18
      %p15 = scmp.ge.s32.totalorder %s14, 4
      %s21 = sphi 0, %s33
      %s22 = sphi 0, %s29
      %s23 = sphi 0, %s21
      %s24 = sphi 0, %s22
      %s25 = sphi 0, %s23
      %s26 = sphi 0, %s24
      %s38 = sphi 0, %s40
      %s41 = sphi 0, %s38
      %s42 = sphi 0, %s41
      %s58 = sphi 0, %s42
      %s62 = sphi 0, %s62
      %s64 = sphi 0, %s62
      %s65 = sphi 0, %s64
      %s79 = sphi 0, %s65
      %s83 = sphi 0, %s83
      %s85 = sphi 0, %s83
      %s86 = sphi 0, %s85
      %s100 = sphi 0, %s86
      %s104 = sphi 0, %s104
      %s106 = sphi 0, %s104
      %s107 = sphi 0, %s106
      %s121 = sphi 0, %s107
      %s125 = sphi 0, %s125
      %s127 = sphi 0, %s125
      %s128 = sphi 0, %s127
      %s142 = sphi 0, %s128
      %s150 = sphi 0, %s152
      %s153 = sphi 0, %s150
      %s154 = sphi 0, %s153
      %s170 = sphi 0, %s154
    $region4: #{tpu_custom_call.1} parent=1 // loop_header_branch
      %17 = sbr.rel (%p15) target = $region8
    $region5: #{tpu_custom_call.1} parent=1 // loop_body
      %s19 = ssub.s32 %s14, 1
      %s20 = ssub.s32 %s14, 2
      %s27 = sadd.s32 1, %s22
      %p28 = scmp.ge.s32.totalorder %s27, 1
      %s29 = scalar_select %p28, 0, %s27
      %s30 = sadd.s32 1, %s21
      %s31 = scalar_select %p28, %s30, %s21
      %p32 = scmp.ge.s32.totalorder %s31, 2
      %s33 = scalar_select %p32, 0, %s31
      %s34 = ssub.s32 %s21, %s33
      %s35 = ssub.s32 %s22, %s29
      %s36 = sor.u32 %s34, %s35
      %p37 = scmp.eq.s32.totalorder %s36, 0
      %s39 = sadd.s32 %s38, 1
      %s40 = scalar_select %p37, %s38, %s39
      %p43 = pneg %p37
      %p44 = scmp.eq.s32.totalorder %s14, 1
      %p45 = por %p43, %p44
      %p46 = scmp.ne.s32.totalorder %s38, %s41
      %p47 = scmp.eq.s32.totalorder %s14, 0
      %p48 = por %p46, %p47
      %p49 = scmp.ne.s32.totalorder %s38, %s41
      %p50 = scmp.eq.s32.totalorder %s19, 1
      %p51 = por %p49, %p50
      %p52 = scmp.ne.s32.totalorder %s41, %s42
      %p53 = scmp.eq.s32.totalorder %s19, 0
      %p54 = por %p52, %p53
      %p55 = scmp.ne.s32.totalorder %s41, %s42
      %p56 = scmp.eq.s32.totalorder %s20, 1
      %p57 = por %p55, %p56
      %p59 = scmp.ne.s32.totalorder %s42, %s58
      %p60 = scmp.eq.s32.totalorder %s20, 0
      %p61 = por %p59, %p60
      %s63 = sadd.s32 %s62, 1
      %p66 = scmp.eq.s32.totalorder %s14, 1
      %p67 = scmp.ne.s32.totalorder %s62, %s64
      %p68 = scmp.eq.s32.totalorder %s14, 0
      %p69 = por %p67, %p68
      %p70 = scmp.ne.s32.totalorder %s62, %s64
      %p71 = scmp.eq.s32.totalorder %s19, 1
      %p72 = por %p70, %p71
      %p73 = scmp.ne.s32.totalorder %s64, %s65
      %p74 = scmp.eq.s32.totalorder %s19, 0
      %p75 = por %p73, %p74
      %p76 = scmp.ne.s32.totalorder %s64, %s65
      %p77 = scmp.eq.s32.totalorder %s20, 1
      %p78 = por %p76, %p77
      %p80 = scmp.ne.s32.totalorder %s65, %s79
      %p81 = scmp.eq.s32.totalorder %s20, 0
      %p82 = por %p80, %p81
      %s84 = sadd.s32 %s83, 1
      %p87 = scmp.eq.s32.totalorder %s14, 1
      %p88 = scmp.ne.s32.totalorder %s83, %s85
      %p89 = scmp.eq.s32.totalorder %s14, 0
      %p90 = por %p88, %p89
      %p91 = scmp.ne.s32.totalorder %s83, %s85
      %p92 = scmp.eq.s32.totalorder %s19, 1
      %p93 = por %p91, %p92
      %p94 = scmp.ne.s32.totalorder %s85, %s86
      %p95 = scmp.eq.s32.totalorder %s19, 0
      %p96 = por %p94, %p95
      %p97 = scmp.ne.s32.totalorder %s85, %s86
      %p98 = scmp.eq.s32.totalorder %s20, 1
      %p99 = por %p97, %p98
      %p101 = scmp.ne.s32.totalorder %s86, %s100
      %p102 = scmp.eq.s32.totalorder %s20, 0
      %p103 = por %p101, %p102
      %s105 = sadd.s32 %s104, 1
      %p108 = scmp.eq.s32.totalorder %s14, 1
      %p109 = scmp.ne.s32.totalorder %s104, %s106
      %p110 = scmp.eq.s32.totalorder %s14, 0
      %p111 = por %p109, %p110
      %p112 = scmp.ne.s32.totalorder %s104, %s106
      %p113 = scmp.eq.s32.totalorder %s19, 1
      %p114 = por %p112, %p113
      %p115 = scmp.ne.s32.totalorder %s106, %s107
      %p116 = scmp.eq.s32.totalorder %s19, 0
      %p117 = por %p115, %p116
      %p118 = scmp.ne.s32.totalorder %s106, %s107
      %p119 = scmp.eq.s32.totalorder %s20, 1
      %p120 = por %p118, %p119
      %p122 = scmp.ne.s32.totalorder %s107, %s121
      %p123 = scmp.eq.s32.totalorder %s20, 0
      %p124 = por %p122, %p123
      %s126 = sadd.s32 %s125, 1
      %p129 = scmp.eq.s32.totalorder %s14, 1
      %p130 = scmp.ne.s32.totalorder %s125, %s127
      %p131 = scmp.eq.s32.totalorder %s14, 0
      %p132 = por %p130, %p131
      %p133 = scmp.ne.s32.totalorder %s125, %s127
      %p134 = scmp.eq.s32.totalorder %s19, 1
      %p135 = por %p133, %p134
      %p136 = scmp.ne.s32.totalorder %s127, %s128
      %p137 = scmp.eq.s32.totalorder %s19, 0
      %p138 = por %p136, %p137
      %p139 = scmp.ne.s32.totalorder %s127, %s128
      %p140 = scmp.eq.s32.totalorder %s20, 1
      %p141 = por %p139, %p140
      %p143 = scmp.ne.s32.totalorder %s128, %s142
      %p144 = scmp.eq.s32.totalorder %s20, 0
      %p145 = por %p143, %p144
      %s146 = ssub.s32 %s21, %s33
      %s147 = ssub.s32 %s22, %s29
      %s148 = sor.u32 %s146, %s147
      %p149 = scmp.eq.s32.totalorder %s148, 0
      %s151 = sadd.s32 %s150, 1
      %s152 = scalar_select %p149, %s150, %s151
      %p155 = pneg %p149
      %p156 = scmp.eq.s32.totalorder %s14, 1
      %p157 = por %p155, %p156
      %p158 = scmp.ne.s32.totalorder %s150, %s153
      %p159 = scmp.eq.s32.totalorder %s14, 0
      %p160 = por %p158, %p159
      %p161 = scmp.ne.s32.totalorder %s150, %s153
      %p162 = scmp.eq.s32.totalorder %s19, 1
      %p163 = por %p161, %p162
      %p164 = scmp.ne.s32.totalorder %s153, %s154
      %p165 = scmp.eq.s32.totalorder %s19, 0
      %p166 = por %p164, %p165
      %p167 = scmp.ne.s32.totalorder %s153, %s154
      %p168 = scmp.eq.s32.totalorder %s20, 1
      %p169 = por %p167, %p168
      %p171 = scmp.ne.s32.totalorder %s154, %s170
      %p172 = scmp.eq.s32.totalorder %s20, 0
      %p173 = por %p171, %p172
      %p174 = scmp.le.s32.totalorder 1, %s14
      %p175 = scmp.lt.s32.totalorder %s14, 3
      %p176 = pnand %p174, %p175
      %p177 = pneg %p176
      // Predicated region
      $region9: #{tpu_custom_call.1} parent=5 // pred_check
        _
      $region10: #{tpu_custom_call.1} parent=5 // pred_check_branch
        %179 = sbr.rel (%p176) target = $region12
      $region11: #{tpu_custom_call.1} parent=5 // pred_region
        %s180 = ssub.s32 %s14, 1
        // Predicated region
        $region13: #{tpu_custom_call.1} parent=11 // pred_check
          %p181 = pneg %p75
        $region14: #{tpu_custom_call.1} parent=11 // pred_check_branch
          %183 = sbr.rel (%p181) target = $region16
        $region15: #{tpu_custom_call.1} parent=11 // pred_region
          _
        $region16: #{tpu_custom_call.1} parent=11 // pred_fallthru
          _
        // Predicated region
        $region17: #{tpu_custom_call.1} parent=11 // pred_check
          %p184 = pneg %p96
        $region18: #{tpu_custom_call.1} parent=11 // pred_check_branch
          %186 = sbr.rel (%p184) target = $region20
        $region19: #{tpu_custom_call.1} parent=11 // pred_region
          _
        $region20: #{tpu_custom_call.1} parent=11 // pred_fallthru
          _
        // Predicated region
        $region21: #{tpu_custom_call.1} parent=11 // pred_check
          %p187 = pneg %p117
        $region22: #{tpu_custom_call.1} parent=11 // pred_check_branch
          %189 = sbr.rel (%p187) target = $region24
        $region23: #{tpu_custom_call.1} parent=11 // pred_region
          _
        $region24: #{tpu_custom_call.1} parent=11 // pred_fallthru
          _
        // Predicated region
        $region25: #{tpu_custom_call.1} parent=11 // pred_check
          %p190 = pneg %p138
        $region26: #{tpu_custom_call.1} parent=11 // pred_check_branch
          %192 = sbr.rel (%p190) target = $region28
        $region27: #{tpu_custom_call.1} parent=11 // pred_region
          _
        $region28: #{tpu_custom_call.1} parent=11 // pred_fallthru
          _
      $region12: #{tpu_custom_call.1} parent=5 // pred_fallthru
        _
      %p193 = scmp.lt.s32.totalorder %s14, 2
      // Predicated region
      $region29: #{tpu_custom_call.1} parent=5 // pred_check
        %p194 = pneg %p193
      $region30: #{tpu_custom_call.1} parent=5 // pred_check_branch
        %196 = sbr.rel (%p194) target = $region32
      $region31: #{tpu_custom_call.1} parent=5 // pred_region
        // Predicated region
        $region33: #{tpu_custom_call.1} parent=31 // pred_check
          %p197 = pneg %p48
        $region34: #{tpu_custom_call.1} parent=31 // pred_check_branch
          %199 = sbr.rel (%p197) target = $region36
        $region35: #{tpu_custom_call.1} parent=31 // pred_region
          %p200 = scmp.lt.s32.totalorder %s21, 1
          %s201 = scalar_select %p200, %s21, 1
          %p202 = scmp.lt.s32.totalorder %s22, 0
          %s203 = scalar_select %p202, %s22, 0
          %s204 = sadd.s32 %s203, %s201
          %s205 = smul.addr %s204, 4
          %s206 = scalar_lea.vmem %s0, %s205
        $region36: #{tpu_custom_call.1} parent=31 // pred_fallthru
          _
      $region32: #{tpu_custom_call.1} parent=5 // pred_fallthru
        _
      %p207 = scmp.le.s32.totalorder 1, %s14
      %p208 = scmp.lt.s32.totalorder %s14, 3
      %p209 = pnand %p207, %p208
      %p210 = pneg %p209
      // Predicated region
      $region37: #{tpu_custom_call.1} parent=5 // pred_check
        _
      $region38: #{tpu_custom_call.1} parent=5 // pred_check_branch
        %212 = sbr.rel (%p209) target = $region40
      $region39: #{tpu_custom_call.1} parent=5 // pred_region
        %s213 = ssub.s32 %s14, 1
        %p214 = scmp.lt.s32.totalorder %s23, 1
        %s215 = scalar_select %p214, %s23, 1
        %p216 = scmp.lt.s32.totalorder %s24, 0
        %s217 = scalar_select %p216, %s24, 0
        %s218 = sadd.s32 %s217, %s215
        %s219 = smul.addr %s218, 4
        %s220 = scalar_lea.vmem %s0, %s219
        %p221 = pneg %p54
        %p222 = pneg %p51
        %p223 = pneg %p75
        %p224 = pneg %p72
        %p225 = pneg %p96
        %p226 = pneg %p93
        %p227 = pneg %p117
        %p228 = pneg %p114
        %p229 = pneg %p138
        %p230 = pneg %p135
        %p231 = pneg %p166
        %p232 = pneg %p163
        %s233 = sand.u32 %s153, 1
        %s234 = scalar_lea.sflag [#allocation3], %s233
        %s235 = sand.u32 %s153, 1
        %s236 = smul.addr %s235, 8
        %s237 = scalar_lea.vmem [#allocation2], %s236
        %p238 = scmp.lt.s32.totalorder %s23, 1
        %s239 = scalar_select %p238, %s23, 1
        %p240 = scmp.lt.s32.totalorder %s24, 0
        %s241 = scalar_select %p240, %s24, 0
        %s242 = sadd.s32 %s241, %s239
        %s243 = smul.addr %s242, 4
        %s244 = scalar_lea.vmem %s0, %s243
        %v245 = vld [vmem:[%s244] sm:$0xf]
        %v246 = vlaneseq
        %v247 = vand.u32 %v246, 127
        %vm248 = vcmp.eq.s32.totalorder %v247, 0
        %249 = vrot.lane.b32.xlu0 %v245, 1
        %v250 = vpop.permute.xlu0 %249
        %v251 = vsel %vm248, 0.0, %v250
        %vm252 = vcmp.eq.s32.totalorder %v247, 127
        %253 = vrot.lane.b32.xlu0 %v245, 127
        %v254 = vpop.permute.xlu0 %253
        %v255 = vsel %vm252, 0.0, %v254
        %v256 = vld [vmem:[%s1] sm:$0xff]
        %s257 = scalar_lea.vmem %s1, 8
        %v258 = vld [vmem:[%s257] sm:$0xff]
        %vm259 = vcmask 31744
        %v261 = vsel %vm259, %v258, 0
        %vm263 = vcmask 1043456
        %v265 = vsel %vm263, %v245, 0
        %267 = vmatprep.subr.mxu0 0.0
        %268 = vmatpush1.msra.mxu0 %v265
        %269 = vmatprep.subr.mxu0 0.0
        %270 = vmatpush1.msra.mxu0 0.0
        %271 = vmatprep.subr.mxu0 0.0
        %272 = vmatpush1.msra.mxu0 0.0
        %273 = vmatprep.subr.mxu0 0.0
        %274 = vmatpush1.msra.mxu0 0.0
        %275 = vmatprep.subr.mxu0 0.0
        %276 = vmatpush1.msra.mxu0 0.0
        %277 = vmatprep.subr.mxu0 0.0
        %278 = vmatpush1.msra.mxu0 0.0
        %279 = vmatprep.subr.mxu0 0.0
        %280 = vmatpush1.msra.mxu0 0.0
        %281 = vmatprep.subr.mxu0 0.0
        %282 = vmatpush1.msra.mxu0 0.0
        %283 = vmatprep.subr.mxu0 0.0
        %284 = vmatpush1.msra.mxu0 0.0
        %285 = vmatprep.subr.mxu0 0.0
        %286 = vmatpush1.msra.mxu0 0.0
        %287 = vmatprep.subr.mxu0 0.0
        %288 = vmatpush1.msra.mxu0 0.0
        %289 = vmatprep.subr.mxu0 0.0
        %290 = vmatpush1.msra.mxu0 0.0
        %291 = vmatprep.subr.mxu0 0.0
        %292 = vmatpush1.msra.mxu0 0.0
        %293 = vmatprep.subr.mxu0 0.0
        %294 = vmatpush1.msra.mxu0 0.0
        %295 = vmatprep.subr.mxu0 0.0
        %296 = vmatpush1.msra.mxu0 0.0
        %297 = vmatprep.subr.mxu0 0.0
        %298 = vmatpush1.msra.mxu0 0.0
        %299 = vmatprep.subr.mxu0 0.0
        %300 = vmatpush1.msra.mxu0 0.0
        %301 = vmatprep.subr.mxu0 0.0
        %302 = vmatpush1.msra.mxu0 0.0
        %303 = vmatprep.subr.mxu0 0.0
        %304 = vmatpush1.msra.mxu0 0.0
        %305 = vmatprep.subr.mxu0 0.0
        %306 = vmatpush1.msra.mxu0 0.0
        %307 = vmatprep.subr.mxu0 0.0
        %308 = vmatpush1.msra.mxu0 0.0
        %309 = vmatprep.subr.mxu0 0.0
        %310 = vmatpush1.msra.mxu0 0.0
        %311 = vmatprep.subr.mxu0 0.0
        %312 = vmatpush1.msra.mxu0 0.0
        %313 = vmatprep.subr.mxu0 0.0
        %314 = vmatpush1.msra.mxu0 0.0
        %315 = vmatprep.subr.mxu0 0.0
        %316 = vmatpush1.msra.mxu0 0.0
        %317 = vmatprep.subr.mxu0 0.0
        %318 = vmatpush1.msra.mxu0 0.0
        %319 = vmatprep.subr.mxu0 0.0
        %320 = vmatpush1.msra.mxu0 0.0
        %321 = vmatprep.subr.mxu0 0.0
        %322 = vmatpush1.msra.mxu0 0.0
        %323 = vmatprep.subr.mxu0 0.0
        %324 = vmatpush1.msra.mxu0 0.0
        %325 = vmatprep.subr.mxu0 0.0
        %326 = vmatpush1.msra.mxu0 0.0
        %327 = vmatprep.subr.mxu0 0.0
        %328 = vmatpush1.msra.mxu0 0.0
        %329 = vmatprep.subr.mxu0 0.0
        %330 = vmatpush1.msra.mxu0 0.0
        %331 = vmatprep.mubr.f32.mxu0 0.0
        %332 = vmatmul.mubr.f32.gmra.mrb[0].mxu0 %v261
        %v333 = vpop.f32.mrb[0].mxu0
        %v334 = vadd.f32 0.0, %v333
        %v335 = vpop.f32.mrb[0].mxu0
        %336 = vdwg.mxu0
        %v338 = vsel %vm259, %v256, 0
        %v341 = vsel %vm263, %v251, 0
        %343 = vmatprep.subr.mxu0 0.0
        %344 = vmatpush1.msra.mxu0 %v341
        %345 = vmatprep.subr.mxu0 0.0
        %346 = vmatpush1.msra.mxu0 0.0
        %347 = vmatprep.subr.mxu0 0.0
        %348 = vmatpush1.msra.mxu0 0.0
        %349 = vmatprep.subr.mxu0 0.0
        %350 = vmatpush1.msra.mxu0 0.0
        %351 = vmatprep.subr.mxu0 0.0
        %352 = vmatpush1.msra.mxu0 0.0
        %353 = vmatprep.subr.mxu0 0.0
        %354 = vmatpush1.msra.mxu0 0.0
        %355 = vmatprep.subr.mxu0 0.0
        %356 = vmatpush1.msra.mxu0 0.0
        %357 = vmatprep.subr.mxu0 0.0
        %358 = vmatpush1.msra.mxu0 0.0
        %359 = vmatprep.subr.mxu0 0.0
        %360 = vmatpush1.msra.mxu0 0.0
        %361 = vmatprep.subr.mxu0 0.0
        %362 = vmatpush1.msra.mxu0 0.0
        %363 = vmatprep.subr.mxu0 0.0
        %364 = vmatpush1.msra.mxu0 0.0
        %365 = vmatprep.subr.mxu0 0.0
        %366 = vmatpush1.msra.mxu0 0.0
        %367 = vmatprep.subr.mxu0 0.0
        %368 = vmatpush1.msra.mxu0 0.0
        %369 = vmatprep.subr.mxu0 0.0
        %370 = vmatpush1.msra.mxu0 0.0
        %371 = vmatprep.subr.mxu0 0.0
        %372 = vmatpush1.msra.mxu0 0.0
        %373 = vmatprep.subr.mxu0 0.0
        %374 = vmatpush1.msra.mxu0 0.0
        %375 = vmatprep.subr.mxu0 0.0
        %376 = vmatpush1.msra.mxu0 0.0
        %377 = vmatprep.subr.mxu0 0.0
        %378 = vmatpush1.msra.mxu0 0.0
        %379 = vmatprep.subr.mxu0 0.0
        %380 = vmatpush1.msra.mxu0 0.0
        %381 = vmatprep.subr.mxu0 0.0
        %382 = vmatpush1.msra.mxu0 0.0
        %383 = vmatprep.subr.mxu0 0.0
        %384 = vmatpush1.msra.mxu0 0.0
        %385 = vmatprep.subr.mxu0 0.0
        %386 = vmatpush1.msra.mxu0 0.0
        %387 = vmatprep.subr.mxu0 0.0
        %388 = vmatpush1.msra.mxu0 0.0
        %389 = vmatprep.subr.mxu0 0.0
        %390 = vmatpush1.msra.mxu0 0.0
        %391 = vmatprep.subr.mxu0 0.0
        %392 = vmatpush1.msra.mxu0 0.0
        %393 = vmatprep.subr.mxu0 0.0
        %394 = vmatpush1.msra.mxu0 0.0
        %395 = vmatprep.subr.mxu0 0.0
        %396 = vmatpush1.msra.mxu0 0.0
        %397 = vmatprep.subr.mxu0 0.0
        %398 = vmatpush1.msra.mxu0 0.0
        %399 = vmatprep.subr.mxu0 0.0
        %400 = vmatpush1.msra.mxu0 0.0
        %401 = vmatprep.subr.mxu0 0.0
        %402 = vmatpush1.msra.mxu0 0.0
        %403 = vmatprep.subr.mxu0 0.0
        %404 = vmatpush1.msra.mxu0 0.0
        %405 = vmatprep.subr.mxu0 0.0
        %406 = vmatpush1.msra.mxu0 0.0
        %407 = vmatprep.mubr.f32.mxu0 0.0
        %408 = vmatmul.mubr.f32.gmra.mrb[0].mxu0 %v338
        %v409 = vpop.f32.mrb[0].mxu0
        %v410 = vadd.f32 %v334, %v409
        %v411 = vpop.f32.mrb[0].mxu0
        %412 = vdwg.mxu0
        %s413 = scalar_lea.vmem %s1, 16
        %v414 = vld [vmem:[%s413] sm:$0xff]
        %v416 = vsel %vm259, %v414, 0
        %v419 = vsel %vm263, %v255, 0
        %421 = vmatprep.subr.mxu0 0.0
        %422 = vmatpush1.msra.mxu0 %v419
        %423 = vmatprep.subr.mxu0 0.0
        %424 = vmatpush1.msra.mxu0 0.0
        %425 = vmatprep.subr.mxu0 0.0
        %426 = vmatpush1.msra.mxu0 0.0
        %427 = vmatprep.subr.mxu0 0.0
        %428 = vmatpush1.msra.mxu0 0.0
        %429 = vmatprep.subr.mxu0 0.0
        %430 = vmatpush1.msra.mxu0 0.0
        %431 = vmatprep.subr.mxu0 0.0
        %432 = vmatpush1.msra.mxu0 0.0
        %433 = vmatprep.subr.mxu0 0.0
        %434 = vmatpush1.msra.mxu0 0.0
        %435 = vmatprep.subr.mxu0 0.0
        %436 = vmatpush1.msra.mxu0 0.0
        %437 = vmatprep.subr.mxu0 0.0
        %438 = vmatpush1.msra.mxu0 0.0
        %439 = vmatprep.subr.mxu0 0.0
        %440 = vmatpush1.msra.mxu0 0.0
        %441 = vmatprep.subr.mxu0 0.0
        %442 = vmatpush1.msra.mxu0 0.0
        %443 = vmatprep.subr.mxu0 0.0
        %444 = vmatpush1.msra.mxu0 0.0
        %445 = vmatprep.subr.mxu0 0.0
        %446 = vmatpush1.msra.mxu0 0.0
        %447 = vmatprep.subr.mxu0 0.0
        %448 = vmatpush1.msra.mxu0 0.0
        %449 = vmatprep.subr.mxu0 0.0
        %450 = vmatpush1.msra.mxu0 0.0
        %451 = vmatprep.subr.mxu0 0.0
        %452 = vmatpush1.msra.mxu0 0.0
        %453 = vmatprep.subr.mxu0 0.0
        %454 = vmatpush1.msra.mxu0 0.0
        %455 = vmatprep.subr.mxu0 0.0
        %456 = vmatpush1.msra.mxu0 0.0
        %457 = vmatprep.subr.mxu0 0.0
        %458 = vmatpush1.msra.mxu0 0.0
        %459 = vmatprep.subr.mxu0 0.0
        %460 = vmatpush1.msra.mxu0 0.0
        %461 = vmatprep.subr.mxu0 0.0
        %462 = vmatpush1.msra.mxu0 0.0
        %463 = vmatprep.subr.mxu0 0.0
        %464 = vmatpush1.msra.mxu0 0.0
        %465 = vmatprep.subr.mxu0 0.0
        %466 = vmatpush1.msra.mxu0 0.0
        %467 = vmatprep.subr.mxu0 0.0
        %468 = vmatpush1.msra.mxu0 0.0
        %469 = vmatprep.subr.mxu0 0.0
        %470 = vmatpush1.msra.mxu0 0.0
        %471 = vmatprep.subr.mxu0 0.0
        %472 = vmatpush1.msra.mxu0 0.0
        %473 = vmatprep.subr.mxu0 0.0
        %474 = vmatpush1.msra.mxu0 0.0
        %475 = vmatprep.subr.mxu0 0.0
        %476 = vmatpush1.msra.mxu0 0.0
        %477 = vmatprep.subr.mxu0 0.0
        %478 = vmatpush1.msra.mxu0 0.0
        %479 = vmatprep.subr.mxu0 0.0
        %480 = vmatpush1.msra.mxu0 0.0
        %481 = vmatprep.subr.mxu0 0.0
        %482 = vmatpush1.msra.mxu0 0.0
        %483 = vmatprep.subr.mxu0 0.0
        %484 = vmatpush1.msra.mxu0 0.0
        %485 = vmatprep.mubr.f32.mxu0 0.0
        %486 = vmatmul.mubr.f32.gmra.mrb[0].mxu0 %v416
        %v487 = vpop.f32.mrb[0].mxu0
        %v488 = vadd.f32 0.0, %v487
        %v489 = vpop.f32.mrb[0].mxu0
        %490 = vdwg.mxu0
        %v491 = vadd.f32 %v410, %v488
        %v492 = vld [vmem:[%s2] sm:$0xff]
        %494 = vset.pattern.permute.xlu0 0
        %495 = vperm.xlu0 %494, %v492
        %v496 = vpop.permute.xlu0 %495
        %v498 = vadd.f32 %v491, %v496
        %v499 = vmax.f32 %v498, 0.0
        %v500 = vld [vmem:[%s3] sm:$0xff]
        %v501 = vld [vmem:[%s4] sm:$0xff]
        %503 = vset.pattern.permute.xlu0 0
        %504 = vperm.xlu0 %503, %v501
        %v505 = vpop.permute.xlu0 %504
        %v508 = vsel %vm259, %v500, 0
        %510 = vmatprep.subr.mxu0 0.0
        %511 = vmatpush1.msra.mxu0 %v265
        %512 = vmatprep.subr.mxu0 0.0
        %513 = vmatpush1.msra.mxu0 0.0
        %514 = vmatprep.subr.mxu0 0.0
        %515 = vmatpush1.msra.mxu0 0.0
        %516 = vmatprep.subr.mxu0 0.0
        %517 = vmatpush1.msra.mxu0 0.0
        %518 = vmatprep.subr.mxu0 0.0
        %519 = vmatpush1.msra.mxu0 0.0
        %520 = vmatprep.subr.mxu0 0.0
        %521 = vmatpush1.msra.mxu0 0.0
        %522 = vmatprep.subr.mxu0 0.0
        %523 = vmatpush1.msra.mxu0 0.0
        %524 = vmatprep.subr.mxu0 0.0
        %525 = vmatpush1.msra.mxu0 0.0
        %526 = vmatprep.subr.mxu0 0.0
        %527 = vmatpush1.msra.mxu0 0.0
        %528 = vmatprep.subr.mxu0 0.0
        %529 = vmatpush1.msra.mxu0 0.0
        %530 = vmatprep.subr.mxu0 0.0
        %531 = vmatpush1.msra.mxu0 0.0
        %532 = vmatprep.subr.mxu0 0.0
        %533 = vmatpush1.msra.mxu0 0.0
        %534 = vmatprep.subr.mxu0 0.0
        %535 = vmatpush1.msra.mxu0 0.0
        %536 = vmatprep.subr.mxu0 0.0
        %537 = vmatpush1.msra.mxu0 0.0
        %538 = vmatprep.subr.mxu0 0.0
        %539 = vmatpush1.msra.mxu0 0.0
        %540 = vmatprep.subr.mxu0 0.0
        %541 = vmatpush1.msra.mxu0 0.0
        %542 = vmatprep.subr.mxu0 0.0
        %543 = vmatpush1.msra.mxu0 0.0
        %544 = vmatprep.subr.mxu0 0.0
        %545 = vmatpush1.msra.mxu0 0.0
        %546 = vmatprep.subr.mxu0 0.0
        %547 = vmatpush1.msra.mxu0 0.0
        %548 = vmatprep.subr.mxu0 0.0
        %549 = vmatpush1.msra.mxu0 0.0
        %550 = vmatprep.subr.mxu0 0.0
        %551 = vmatpush1.msra.mxu0 0.0
        %552 = vmatprep.subr.mxu0 0.0
        %553 = vmatpush1.msra.mxu0 0.0
        %554 = vmatprep.subr.mxu0 0.0
        %555 = vmatpush1.msra.mxu0 0.0
        %556 = vmatprep.subr.mxu0 0.0
        %557 = vmatpush1.msra.mxu0 0.0
        %558 = vmatprep.subr.mxu0 0.0
        %559 = vmatpush1.msra.mxu0 0.0
        %560 = vmatprep.subr.mxu0 0.0
        %561 = vmatpush1.msra.mxu0 0.0
        %562 = vmatprep.subr.mxu0 0.0
        %563 = vmatpush1.msra.mxu0 0.0
        %564 = vmatprep.subr.mxu0 0.0
        %565 = vmatpush1.msra.mxu0 0.0
        %566 = vmatprep.subr.mxu0 0.0
        %567 = vmatpush1.msra.mxu0 0.0
        %568 = vmatprep.subr.mxu0 0.0
        %569 = vmatpush1.msra.mxu0 0.0
        %570 = vmatprep.subr.mxu0 0.0
        %571 = vmatpush1.msra.mxu0 0.0
        %572 = vmatprep.subr.mxu0 0.0
        %573 = vmatpush1.msra.mxu0 0.0
        %574 = vmatprep.mubr.f32.mxu0 0.0
        %575 = vmatmul.mubr.f32.gmra.mrb[0].mxu0 %v508
        %v576 = vpop.f32.mrb[0].mxu0
        %v577 = vadd.f32 %v505, %v576
        %v578 = vpop.f32.mrb[0].mxu0
        %579 = vdwg.mxu0
        %v580 = vadd.f32 %v499, %v577
        %581 = vst [vmem:[%s237] sm:$0xff] %v580
        %s582 = sand.u32 %s153, 1
        %s583 = scalar_lea.sflag [#allocation3], %s582
        %s584 = sand.u32 %s153, 1
        %s585 = smul.addr %s584, 8
        %s586 = scalar_lea.vmem [#allocation2], %s585
        // Predicated region
        $region41: #{tpu_custom_call.1} parent=39 // pred_check
          %p587 = pneg %p163
        $region42: #{tpu_custom_call.1} parent=39 // pred_check_branch
          %589 = sbr.rel (%p587) target = $region44
        $region43: #{tpu_custom_call.1} parent=39 // pred_region
          %s591 = ssub.s32 128, 128
          %592 = vsyncadd %s583, %s591
          %s593 = sadd.s32 %s24, %s23
          %s594 = smul.addr %s593, 128
          %s595 = scalar_lea.hbm %s5, %s594
          %s597 = sshll.u32 %s586, 4
          %s598 = int_to_ptr.vmem [resolvable:$true] %s597
          %600 = dma.vmem_to_hbm [thread:$0]  %s598, 128, %s595, %s583
        $region44: #{tpu_custom_call.1} parent=39 // pred_fallthru
          _
      $region40: #{tpu_custom_call.1} parent=5 // pred_fallthru
        _
      %p601 = scmp.le.s32.totalorder 2, %s14
      // Predicated region
      $region45: #{tpu_custom_call.1} parent=5 // pred_check
        %p602 = pneg %p601
      $region46: #{tpu_custom_call.1} parent=5 // pred_check_branch
        %604 = sbr.rel (%p602) target = $region48
      $region47: #{tpu_custom_call.1} parent=5 // pred_region
        %s605 = ssub.s32 %s14, 2
        // Predicated region
        $region49: #{tpu_custom_call.1} parent=47 // pred_check
          %p606 = pneg %p169
        $region50: #{tpu_custom_call.1} parent=47 // pred_check_branch
          %608 = sbr.rel (%p606) target = $region52
        $region51: #{tpu_custom_call.1} parent=47 // pred_region
          %s609 = sand.u32 %s154, 1
          %s610 = scalar_lea.sflag [#allocation3], %s609
          %s611 = sand.u32 %s154, 1
          %s612 = smul.addr %s611, 8
          %s613 = scalar_lea.vmem [#allocation2], %s612
          %614 = dma.done %s610, 128
        $region52: #{tpu_custom_call.1} parent=47 // pred_fallthru
          _
      $region48: #{tpu_custom_call.1} parent=5 // pred_fallthru
        _
    $region6: #{tpu_custom_call.1} parent=1 // loop_footer
      %s18 = sadd.s32 1, %s14
    $region7: #{tpu_custom_call.1} parent=1 // loop_footer_branch
      %13 = sbr.rel target = $region3
    $region8: #{tpu_custom_call.1} parent=1 // loop_exit
      _
    %615 = vsyncpa [#allocation3], 1
    %s616 = scalar_lea.sflag [#allocation3], 1
    %617 = vsyncpa %s616, 1

</llo_original>
